<compile_context>
chip_gen: v5e
topology: v5e:2x2
jax: 0.10.0
libtpu: 0.0.40
codegen_flags: <defaults>
</compile_context>

<pallas_src>
import jax
import jax.numpy as jnp
from jax.experimental import pallas as pl
from jax.experimental.pallas import tpu as pltpu

# Module-consistent sizes (input_size = 16 + 48 = 64, hidden_size default 128).
ATTR_SIZE = 16
SPTM_SIZE = 48
INPUT_SIZE = ATTR_SIZE + SPTM_SIZE
HIDDEN = 128
NUM_FINAL_FCS = 3          # num_fimal_fcs
BATCH = 64                 # small demo batch


def _round_up(x, m):
    return ((x + m - 1) // m) * m


def _num_tensorcores() -> int:
    """v7x chips expose 2 TensorCores per chip; v5e / v6e have 1."""
    try:
        kind = jax.devices()[0].device_kind.lower()
    except Exception:
        return 1
    return 2 if "v7" in kind else 1


NUM_TILES = _num_tensorcores()


def entire_estimator_kernel(attr_ref, sptm_ref, w_a_ref, w_s_ref, b_in_ref,
                            w_res_ref, b_res_ref, w_out_ref, b_out_ref, o_ref):
    """One batch tile: input2hidden -> residual stack -> hidden2out."""
    # input2hidden with the concat folded into two small-K f32 MXU passes.
    hidden = (jnp.dot(attr_ref[...], w_a_ref[...],
                      preferred_element_type=jnp.float32)
              + jnp.dot(sptm_ref[...], w_s_ref[...],
                        preferred_element_type=jnp.float32)
              + b_in_ref[...])

    # Residual blocks: hidden += relu(hidden @ W_i + b_i) (static unroll).
    # bf16 operands on the MXU, f32 accumulation.
    for i in range(NUM_FINAL_FCS):
        res = jnp.dot(hidden.astype(jnp.bfloat16), w_res_ref[i],
                      preferred_element_type=jnp.float32) + b_res_ref[i]
        hidden = hidden + jnp.maximum(res, 0.0)

    # hidden2out (N=1), emitted lane-dense as a (1, TB) row:
    # contract last dims of (1, H) x (TB, H) -> (1, TB).
    out_row = jax.lax.dot_general(
        w_out_ref[...], hidden,
        dimension_numbers=(((1,), (1,)), ((), ())),
        preferred_element_type=jnp.float32)
    tb = o_ref.shape[-1]
    o_ref[...] = (out_row + b_out_ref[0]).reshape(1, 1, tb)


@jax.jit
def entire_estimator_forward(attr_t, sptm_t, params):
    B, a = attr_t.shape
    s = sptm_t.shape[1]

    # One maximal batch tile per TensorCore.  Round to the sublane granule
    # (16); rounding further to 256 only matters for MXU row fill at large
    # batches and would just waste padded work at demo sizes.
    num_tiles = NUM_TILES if B >= 2 * NUM_TILES else 1
    tb = _round_up(pl.cdiv(B, num_tiles), 16)
    b_pad = tb * num_tiles

    if b_pad != B:
        attr_p = jnp.zeros((b_pad, a), attr_t.dtype).at[:B].set(attr_t)
        sptm_p = jnp.zeros((b_pad, s), sptm_t.dtype).at[:B].set(sptm_t)
    else:
        attr_p, sptm_p = attr_t, sptm_t

    flops = 2 * b_pad * (a * HIDDEN + s * HIDDEN
                         + NUM_FINAL_FCS * HIDDEN * HIDDEN + HIDDEN)
    bytes_accessed = (
        (attr_p.size + sptm_p.size) * 4
        + (params["w_a"].size + params["w_s"].size + params["b_in"].size) * 4
        + params["w_res"].size * 2
        + (params["b_res"].size + params["w_out"].size + params["b_out"].size) * 4
        + b_pad * 4)

    out = pl.pallas_call(
        entire_estimator_kernel,
        out_shape=jax.ShapeDtypeStruct((num_tiles, 1, tb), jnp.float32),
        grid=(num_tiles,),
        in_specs=[
            pl.BlockSpec((tb, a), lambda i: (i, 0)),                             # attr
            pl.BlockSpec((tb, s), lambda i: (i, 0)),                             # sptm
            pl.BlockSpec((a, HIDDEN), lambda i: (0, 0)),                         # w_a
            pl.BlockSpec((s, HIDDEN), lambda i: (0, 0)),                         # w_s
            pl.BlockSpec((1, HIDDEN), lambda i: (0, 0)),                         # b_in
            pl.BlockSpec((NUM_FINAL_FCS, HIDDEN, HIDDEN), lambda i: (0, 0, 0)),  # w_res
            pl.BlockSpec((NUM_FINAL_FCS, 1, HIDDEN), lambda i: (0, 0, 0)),       # b_res
            pl.BlockSpec((1, HIDDEN), lambda i: (0, 0)),                         # w_out
            pl.BlockSpec(memory_space=pltpu.MemorySpace.SMEM),                   # b_out
        ],
        out_specs=pl.BlockSpec((1, 1, tb), lambda i: (i, 0, 0)),
        compiler_params=pltpu.CompilerParams(
            dimension_semantics=("parallel",)),
        cost_estimate=pl.CostEstimate(flops=flops, transcendentals=0,
                                      bytes_accessed=bytes_accessed),
    )(attr_p, sptm_p, params["w_a"], params["w_s"], params["b_in"],
      params["w_res"], params["b_res"], params["w_out"], params["b_out"])

    return out.reshape(b_pad, 1)[:B]


def init_params(key):
    """Deterministic synthetic parameters (shapes match the torch module)."""
    ks = jax.random.split(key, 6)
    scale_in = 1.0 / jnp.sqrt(INPUT_SIZE)
    scale_h = 1.0 / jnp.sqrt(HIDDEN)
    return {
        "w_in": jax.random.uniform(ks[0], (INPUT_SIZE, HIDDEN), jnp.float32,
                                   -scale_in, scale_in),
        "b_in": jax.random.uniform(ks[1], (1, HIDDEN), jnp.float32,
                                   -scale_in, scale_in),
        "w_res": jax.random.uniform(ks[2], (NUM_FINAL_FCS, HIDDEN, HIDDEN),
                                    jnp.float32, -scale_h, scale_h),
        "b_res": jax.random.uniform(ks[3], (NUM_FINAL_FCS, 1, HIDDEN),
                                    jnp.float32, -scale_h, scale_h),
        "w_out": jax.random.uniform(ks[4], (HIDDEN, 1), jnp.float32,
                                    -scale_h, scale_h),
        "b_out": jax.random.uniform(ks[5], (1, 1), jnp.float32,
                                    -scale_h, scale_h),
    }


def prepare_params(p):
    """One-time weight prep, done OUTSIDE the jitted forward: split the
    input2hidden weight across the concat boundary, pre-cast residual weights
    to bf16, reshape the output head for the lane-dense final dot."""
    return {
        "w_a": p["w_in"][:ATTR_SIZE],                 # (16, 128) f32
        "w_s": p["w_in"][ATTR_SIZE:],                 # (48, 128) f32
        "b_in": p["b_in"],                            # (1, 128)  f32
        "w_res": p["w_res"].astype(jnp.bfloat16),     # (3, 128, 128) bf16
        "b_res": p["b_res"],                          # (3, 1, 128) f32
        "w_out": p["w_out"].reshape(1, HIDDEN),       # (1, 128)  f32
        "b_out": p["b_out"].reshape(1),               # (1,)      f32 -> SMEM
    }


def reference_forward(attr_t, sptm_t, p):
    """Pure-JAX f32 reference mirroring the PyTorch forward exactly."""
    x = jnp.concatenate([attr_t, sptm_t], axis=1)
    h = x @ p["w_in"] + p["b_in"]
    for i in range(NUM_FINAL_FCS):
        h = h + jax.nn.relu(h @ p["w_res"][i] + p["b_res"][i])
    return h @ p["w_out"] + p["b_out"]


# TODO(synk): eval_on_batch (relative-L1 loss helper) is training-only and not
# part of the forward pass; it is not implemented as a kernel.

if __name__ == "__main__":
    key = jax.random.PRNGKey(0)
    k_attr, k_sptm, k_params = jax.random.split(key, 3)

    attr_t = jax.random.normal(k_attr, (BATCH, ATTR_SIZE), jnp.float32)
    sptm_t = jax.random.normal(k_sptm, (BATCH, SPTM_SIZE), jnp.float32)
    raw_params = init_params(k_params)
    params = prepare_params(raw_params)    # one-time prep, outside the jit

    out = jax.block_until_ready(entire_estimator_forward(attr_t, sptm_t, params))
    ref = reference_forward(attr_t, sptm_t, raw_params)

    assert out.shape == (BATCH, 1)
    # bf16 residual-matmul operands with f32 accumulation: ~1e-2 error expected.
    assert jnp.allclose(out, ref, atol=5e-2, rtol=5e-2)

    print("KERNEL_OK")
</pallas_src>

<mosaic_0001>
module attributes {stable_mosaic.version = 11 : i64} {
  func.func @entire_estimator_kernel(%arg0: i32, %arg1: memref<64x16xf32, #tpu.memory_space<vmem>>, %arg2: memref<64x48xf32, #tpu.memory_space<vmem>>, %arg3: memref<16x128xf32, #tpu.memory_space<vmem>>, %arg4: memref<48x128xf32, #tpu.memory_space<vmem>>, %arg5: memref<1x128xf32, #tpu.memory_space<vmem>>, %arg6: memref<3x128x128xbf16, #tpu.memory_space<vmem>>, %arg7: memref<3x1x128xf32, #tpu.memory_space<vmem>>, %arg8: memref<1x128xf32, #tpu.memory_space<vmem>>, %arg9: memref<1xf32, #tpu.memory_space<smem>>, %arg10: memref<1x1x64xf32, #tpu.memory_space<vmem>>) attributes {dimension_semantics = [#tpu.dimension_semantics<parallel>], iteration_bounds = array<i64: 1>, scalar_prefetch = 0 : i64, scratch_operands = 0 : i64, tpu.core_type = #tpu.core_type<tc>, window_params = [{transform_indices = @transform_0, window_bounds = array<i64: 64, 16>}, {transform_indices = @transform_1, window_bounds = array<i64: 64, 48>}, {pipeline_mode = #tpu.pipeline_mode<synchronous>, transform_indices = @transform_2, window_bounds = array<i64: 16, 128>}, {pipeline_mode = #tpu.pipeline_mode<synchronous>, transform_indices = @transform_3, window_bounds = array<i64: 48, 128>}, {pipeline_mode = #tpu.pipeline_mode<synchronous>, transform_indices = @transform_4, window_bounds = array<i64: 1, 128>}, {pipeline_mode = #tpu.pipeline_mode<synchronous>, transform_indices = @transform_5, window_bounds = array<i64: 3, 128, 128>}, {pipeline_mode = #tpu.pipeline_mode<synchronous>, transform_indices = @transform_6, window_bounds = array<i64: 3, 1, 128>}, {pipeline_mode = #tpu.pipeline_mode<synchronous>, transform_indices = @transform_7, window_bounds = array<i64: 1, 128>}, {transform_indices = @transform_8, window_bounds = array<i64: 1>}, {transform_indices = @transform_9, window_bounds = array<i64: 1, 1, 64>}]} {
    %c0 = arith.constant 0 : index
    %c0_0 = arith.constant 0 : index
    %0 = vector.load %arg1[%c0, %c0_0] : memref<64x16xf32, #tpu.memory_space<vmem>>, vector<64x16xf32>
    %c0_1 = arith.constant 0 : index
    %c0_2 = arith.constant 0 : index
    %1 = vector.load %arg3[%c0_1, %c0_2] : memref<16x128xf32, #tpu.memory_space<vmem>>, vector<16x128xf32>
    %cst = arith.constant dense<0.000000e+00> : vector<64x128xf32>
    %2 = tpu.matmul %0, %1, %cst {dimension_numbers = #tpu.dot_dimension_numbers<[1], [0], [0], [1], [0, 0, 1, 1], [], []>} : vector<64x16xf32>, vector<16x128xf32>, vector<64x128xf32> -> vector<64x128xf32>
    %c0_3 = arith.constant 0 : index
    %c0_4 = arith.constant 0 : index
    %3 = vector.load %arg2[%c0_3, %c0_4] : memref<64x48xf32, #tpu.memory_space<vmem>>, vector<64x48xf32>
    %c0_5 = arith.constant 0 : index
    %c0_6 = arith.constant 0 : index
    %4 = vector.load %arg4[%c0_5, %c0_6] : memref<48x128xf32, #tpu.memory_space<vmem>>, vector<48x128xf32>
    %cst_7 = arith.constant dense<0.000000e+00> : vector<64x128xf32>
    %5 = tpu.matmul %3, %4, %cst_7 {dimension_numbers = #tpu.dot_dimension_numbers<[1], [0], [0], [1], [0, 0, 1, 1], [], []>} : vector<64x48xf32>, vector<48x128xf32>, vector<64x128xf32> -> vector<64x128xf32>
    %6 = arith.addf %2, %5 : vector<64x128xf32>
    %c0_8 = arith.constant 0 : index
    %c0_9 = arith.constant 0 : index
    %7 = vector.load %arg5[%c0_8, %c0_9] : memref<1x128xf32, #tpu.memory_space<vmem>>, vector<1x128xf32>
    %8 = vector.broadcast %7 : vector<1x128xf32> to vector<64x128xf32>
    %9 = arith.addf %6, %8 : vector<64x128xf32>
    %10 = arith.truncf %9 : vector<64x128xf32> to vector<64x128xbf16>
    %c0_10 = arith.constant 0 : index
    %c0_11 = arith.constant 0 : index
    %c0_12 = arith.constant 0 : index
    %11 = vector.load %arg6[%c0_10, %c0_11, %c0_12] : memref<3x128x128xbf16, #tpu.memory_space<vmem>>, vector<1x128x128xbf16>
    %12 = vector.shape_cast %11 : vector<1x128x128xbf16> to vector<128x128xbf16>
    %cst_13 = arith.constant dense<0.000000e+00> : vector<64x128xf32>
    %13 = tpu.matmul %10, %12, %cst_13 {dimension_numbers = #tpu.dot_dimension_numbers<[1], [0], [0], [1], [0, 0, 1, 1], [], []>} : vector<64x128xbf16>, vector<128x128xbf16>, vector<64x128xf32> -> vector<64x128xf32>
    %c0_14 = arith.constant 0 : index
    %c0_15 = arith.constant 0 : index
    %c0_16 = arith.constant 0 : index
    %14 = vector.load %arg7[%c0_14, %c0_15, %c0_16] : memref<3x1x128xf32, #tpu.memory_space<vmem>>, vector<1x1x128xf32>
    %15 = vector.shape_cast %14 : vector<1x1x128xf32> to vector<1x128xf32>
    %16 = vector.broadcast %15 : vector<1x128xf32> to vector<64x128xf32>
    %17 = arith.addf %13, %16 : vector<64x128xf32>
    %cst_17 = arith.constant 0.000000e+00 : f32
    %18 = vector.broadcast %cst_17 : f32 to vector<64x128xf32>
    %19 = arith.maximumf %17, %18 : vector<64x128xf32>
    %20 = arith.addf %9, %19 : vector<64x128xf32>
    %21 = arith.truncf %20 : vector<64x128xf32> to vector<64x128xbf16>
    %c1 = arith.constant 1 : index
    %c0_18 = arith.constant 0 : index
    %c0_19 = arith.constant 0 : index
    %22 = vector.load %arg6[%c1, %c0_18, %c0_19] : memref<3x128x128xbf16, #tpu.memory_space<vmem>>, vector<1x128x128xbf16>
    %23 = vector.shape_cast %22 : vector<1x128x128xbf16> to vector<128x128xbf16>
    %cst_20 = arith.constant dense<0.000000e+00> : vector<64x128xf32>
    %24 = tpu.matmul %21, %23, %cst_20 {dimension_numbers = #tpu.dot_dimension_numbers<[1], [0], [0], [1], [0, 0, 1, 1], [], []>} : vector<64x128xbf16>, vector<128x128xbf16>, vector<64x128xf32> -> vector<64x128xf32>
    %c1_21 = arith.constant 1 : index
    %c0_22 = arith.constant 0 : index
    %c0_23 = arith.constant 0 : index
    %25 = vector.load %arg7[%c1_21, %c0_22, %c0_23] : memref<3x1x128xf32, #tpu.memory_space<vmem>>, vector<1x1x128xf32>
    %26 = vector.shape_cast %25 : vector<1x1x128xf32> to vector<1x128xf32>
    %27 = vector.broadcast %26 : vector<1x128xf32> to vector<64x128xf32>
    %28 = arith.addf %24, %27 : vector<64x128xf32>
    %cst_24 = arith.constant 0.000000e+00 : f32
    %29 = vector.broadcast %cst_24 : f32 to vector<64x128xf32>
    %30 = arith.maximumf %28, %29 : vector<64x128xf32>
    %31 = arith.addf %20, %30 : vector<64x128xf32>
    %32 = arith.truncf %31 : vector<64x128xf32> to vector<64x128xbf16>
    %c2 = arith.constant 2 : index
    %c0_25 = arith.constant 0 : index
    %c0_26 = arith.constant 0 : index
    %33 = vector.load %arg6[%c2, %c0_25, %c0_26] : memref<3x128x128xbf16, #tpu.memory_space<vmem>>, vector<1x128x128xbf16>
    %34 = vector.shape_cast %33 : vector<1x128x128xbf16> to vector<128x128xbf16>
    %cst_27 = arith.constant dense<0.000000e+00> : vector<64x128xf32>
    %35 = tpu.matmul %32, %34, %cst_27 {dimension_numbers = #tpu.dot_dimension_numbers<[1], [0], [0], [1], [0, 0, 1, 1], [], []>} : vector<64x128xbf16>, vector<128x128xbf16>, vector<64x128xf32> -> vector<64x128xf32>
    %c2_28 = arith.constant 2 : index
    %c0_29 = arith.constant 0 : index
    %c0_30 = arith.constant 0 : index
    %36 = vector.load %arg7[%c2_28, %c0_29, %c0_30] : memref<3x1x128xf32, #tpu.memory_space<vmem>>, vector<1x1x128xf32>
    %37 = vector.shape_cast %36 : vector<1x1x128xf32> to vector<1x128xf32>
    %38 = vector.broadcast %37 : vector<1x128xf32> to vector<64x128xf32>
    %39 = arith.addf %35, %38 : vector<64x128xf32>
    %cst_31 = arith.constant 0.000000e+00 : f32
    %40 = vector.broadcast %cst_31 : f32 to vector<64x128xf32>
    %41 = arith.maximumf %39, %40 : vector<64x128xf32>
    %42 = arith.addf %31, %41 : vector<64x128xf32>
    %c0_32 = arith.constant 0 : index
    %c0_33 = arith.constant 0 : index
    %43 = vector.load %arg8[%c0_32, %c0_33] : memref<1x128xf32, #tpu.memory_space<vmem>>, vector<1x128xf32>
    %cst_34 = arith.constant dense<0.000000e+00> : vector<1x64xf32>
    %44 = tpu.matmul %43, %42, %cst_34 {dimension_numbers = #tpu.dot_dimension_numbers<[1], [1], [0], [0], [0, 0, 1, 0], [], []>} : vector<1x128xf32>, vector<64x128xf32>, vector<1x64xf32> -> vector<1x64xf32>
    %c0_35 = arith.constant 0 : index
    %45 = memref.load %arg9[%c0_35] : memref<1xf32, #tpu.memory_space<smem>>
    %46 = vector.broadcast %45 : f32 to vector<1x64xf32>
    %47 = arith.addf %44, %46 : vector<1x64xf32>
    %48 = vector.shape_cast %47 : vector<1x64xf32> to vector<1x1x64xf32>
    %c0_36 = arith.constant 0 : index
    %c0_37 = arith.constant 0 : index
    %c0_38 = arith.constant 0 : index
    %49 = vector.load %arg10[%c0_36, %c0_37, %c0_38] : memref<1x1x64xf32, #tpu.memory_space<vmem>>, vector<1x1x64xf32>
    tpu.vector_store %arg10[%c0_36, %c0_37, %c0_38], %48 {strides = array<i32>} : memref<1x1x64xf32, #tpu.memory_space<vmem>>, vector<1x1x64xf32>,
    return
  }
  func.func @transform_0(%arg0: i32) -> (i32, i32) {
    %c0_i32 = arith.constant 0 : i32
    %c0_i32_0 = arith.constant 0 : i32
    return %arg0, %c0_i32 : i32, i32
  }
  func.func @transform_1(%arg0: i32) -> (i32, i32) {
    %c0_i32 = arith.constant 0 : i32
    %c0_i32_0 = arith.constant 0 : i32
    return %arg0, %c0_i32 : i32, i32
  }
  func.func @transform_2(%arg0: i32) -> (i32, i32) {
    %c0_i32 = arith.constant 0 : i32
    %c0_i32_0 = arith.constant 0 : i32
    %c0_i32_1 = arith.constant 0 : i32
    return %c0_i32, %c0_i32_0 : i32, i32
  }
  func.func @transform_3(%arg0: i32) -> (i32, i32) {
    %c0_i32 = arith.constant 0 : i32
    %c0_i32_0 = arith.constant 0 : i32
    %c0_i32_1 = arith.constant 0 : i32
    return %c0_i32, %c0_i32_0 : i32, i32
  }
  func.func @transform_4(%arg0: i32) -> (i32, i32) {
    %c0_i32 = arith.constant 0 : i32
    %c0_i32_0 = arith.constant 0 : i32
    %c0_i32_1 = arith.constant 0 : i32
    return %c0_i32, %c0_i32_0 : i32, i32
  }
  func.func @transform_5(%arg0: i32) -> (i32, i32, i32) {
    %c0_i32 = arith.constant 0 : i32
    %c0_i32_0 = arith.constant 0 : i32
    %c0_i32_1 = arith.constant 0 : i32
    %c0_i32_2 = arith.constant 0 : i32
    return %c0_i32, %c0_i32_0, %c0_i32_1 : i32, i32, i32
  }
  func.func @transform_6(%arg0: i32) -> (i32, i32, i32) {
    %c0_i32 = arith.constant 0 : i32
    %c0_i32_0 = arith.constant 0 : i32
    %c0_i32_1 = arith.constant 0 : i32
    %c0_i32_2 = arith.constant 0 : i32
    return %c0_i32, %c0_i32_0, %c0_i32_1 : i32, i32, i32
  }
  func.func @transform_7(%arg0: i32) -> (i32, i32) {
    %c0_i32 = arith.constant 0 : i32
    %c0_i32_0 = arith.constant 0 : i32
    %c0_i32_1 = arith.constant 0 : i32
    return %c0_i32, %c0_i32_0 : i32, i32
  }
  func.func @transform_8(%arg0: i32) -> i32 {
    %c0_i32 = arith.constant 0 : i32
    %c0_i32_0 = arith.constant 0 : i32
    return %c0_i32 : i32
  }
  func.func @transform_9(%arg0: i32) -> (i32, i32, i32) {
    %c0_i32 = arith.constant 0 : i32
    %c0_i32_0 = arith.constant 0 : i32
    %c0_i32_1 = arith.constant 0 : i32
    return %arg0, %c0_i32, %c0_i32_0 : i32, i32, i32
  }
}

</mosaic_0001>

<llo_original>
// kernel: entire_estimator_forward.1
$region0: #{entire_estimator_forward.1}
  #allocation0 [shape = 'u32[]', space=smem, size = 0x4, offset = 0x4, fixed_abs, tag = 'smem constant byte address 0x4 - core index']
  #allocation1 [shape = 'u32[72,128]{1,0:T(1,128)}', space=vmem, size = 0x9000, scoped, tag = 'internal scratch']
  #allocation2 [shape = 'f32[1]{0:T(128)S(6)}', space=smem, size = 0x200, scoped, tag = 'scoped memory for entire_estimator_forward.1']
  %s0 = inlined_call_operand.vmem [shape: f32[64,16], index: 0, kind: input, shape index: {}]
  %s1 = inlined_call_operand.vmem [shape: f32[64,48], index: 1, kind: input, shape index: {}]
  %s2 = inlined_call_operand.hbm [shape: f32[16,128], index: 2, kind: input, shape index: {}]
  %s3 = inlined_call_operand.hbm [shape: f32[48,128], index: 3, kind: input, shape index: {}]
  %s4 = inlined_call_operand.vmem [shape: f32[1,128], index: 4, kind: input, shape index: {}]
  %s5 = inlined_call_operand.vmem [shape: bf16[3,128,128], index: 5, kind: input, shape index: {}]
  %s6 = inlined_call_operand.vmem [shape: f32[3,1,128], index: 6, kind: input, shape index: {}]
  %s7 = inlined_call_operand.vmem [shape: f32[1,128], index: 7, kind: input, shape index: {}]
  %s8 = inlined_call_operand.<no memory space> [shape: f32[1], index: 8, kind: input, shape index: {}]
  %s9 = inlined_call_operand.hbm [shape: f32[1,1,64], index: 9, kind: output, shape index: {}]
  %s10 = sld [smem:[#allocation0]]
  $region54: #{entire_estimator_forward.1} parent=0
    _
  %s12 = ssub.s32 1, %s10
  %s13 = scalar_select 0, %s12, %s10
  %14 = sst [smem:[#allocation2]] %s8
  $region1: #{entire_estimator_forward.1} parent=0
    #allocation3 [shape = 'u8[8192]{0}', space=vmem, size = 0x2000, scoped, tag = 'input window, operand 2, single buffered']
    #allocation4 [shape = 's32[1]{0}', space=sflag, size = 0x4, scoped, tag = 'scoped memory for entire_estimator_forward.1']
    #allocation5 [shape = 's32[1]{0}', space=sflag, size = 0x4, scoped, tag = 'scoped memory for entire_estimator_forward.1']
    #allocation6 [shape = 'u8[24576]{0}', space=vmem, size = 0x6000, scoped, tag = 'input window, operand 3, single buffered']
    #allocation7 [shape = 's32[1]{0}', space=sflag, size = 0x4, scoped, tag = 'scoped memory for entire_estimator_forward.1']
    #allocation8 [shape = 'u8[512]{0}', space=vmem, size = 0x400, scoped, tag = 'output window, operand 0, single buffered']
    %15 = vsyncpa [#allocation4], 0
    %16 = vsyncpa [#allocation7], 0
    %17 = vsyncpa [#allocation5], 0
    // Predicated region
    $region2: #{entire_estimator_forward.1} parent=1 // pred_check
      _
    $region3: #{entire_estimator_forward.1} parent=1 // pred_check_branch
      %19 = sbr.rel (0) target = $region5
    $region4: #{entire_estimator_forward.1} parent=1 // pred_region
      _
    $region5: #{entire_estimator_forward.1} parent=1 // pred_fallthru
      _
    // Predicated region
    $region6: #{entire_estimator_forward.1} parent=1 // pred_check
      _
    $region7: #{entire_estimator_forward.1} parent=1 // pred_check_branch
      %21 = sbr.rel (0) target = $region9
    $region8: #{entire_estimator_forward.1} parent=1 // pred_region
      _
    $region9: #{entire_estimator_forward.1} parent=1 // pred_fallthru
      _
    // Predicated region
    $region10: #{entire_estimator_forward.1} parent=1 // pred_check
      _
    $region11: #{entire_estimator_forward.1} parent=1 // pred_check_branch
      %23 = sbr.rel (0) target = $region13
    $region12: #{entire_estimator_forward.1} parent=1 // pred_region
      %25 = vsyncadd [#allocation4], 0
      %s26 = sshll.u32 %s2, 4
      %s27 = int_to_ptr.hbm [resolvable:$true] %s26
      %s28 = sshll.u32 [#allocation3], 4
      %s29 = int_to_ptr.vmem [resolvable:$true] %s28
      %34 = dma.hbm_to_vmem [thread:$0]  %s27, 256, %s29, [#allocation4], 128, 128, 8
    $region13: #{entire_estimator_forward.1} parent=1 // pred_fallthru
      _
    // Predicated region
    $region14: #{entire_estimator_forward.1} parent=1 // pred_check
      _
    $region15: #{entire_estimator_forward.1} parent=1 // pred_check_branch
      %36 = sbr.rel (0) target = $region17
    $region16: #{entire_estimator_forward.1} parent=1 // pred_region
      %38 = vsyncadd [#allocation7], 0
      %s39 = sshll.u32 %s3, 4
      %s40 = int_to_ptr.hbm [resolvable:$true] %s39
      %s41 = sshll.u32 [#allocation6], 4
      %s42 = int_to_ptr.vmem [resolvable:$true] %s41
      %47 = dma.hbm_to_vmem [thread:$0]  %s40, 768, %s42, [#allocation7], 128, 128, 8
    $region17: #{entire_estimator_forward.1} parent=1 // pred_fallthru
      _
    // Predicated region
    $region18: #{entire_estimator_forward.1} parent=1 // pred_check
      _
    $region19: #{entire_estimator_forward.1} parent=1 // pred_check_branch
      %49 = sbr.rel (0) target = $region21
    $region20: #{entire_estimator_forward.1} parent=1 // pred_region
      _
    $region21: #{entire_estimator_forward.1} parent=1 // pred_fallthru
      _
    // Predicated region
    $region22: #{entire_estimator_forward.1} parent=1 // pred_check
      _
    $region23: #{entire_estimator_forward.1} parent=1 // pred_check_branch
      %51 = sbr.rel (0) target = $region25
    $region24: #{entire_estimator_forward.1} parent=1 // pred_region
      _
    $region25: #{entire_estimator_forward.1} parent=1 // pred_fallthru
      _
    // Predicated region
    $region26: #{entire_estimator_forward.1} parent=1 // pred_check
      _
    $region27: #{entire_estimator_forward.1} parent=1 // pred_check_branch
      %53 = sbr.rel (0) target = $region29
    $region28: #{entire_estimator_forward.1} parent=1 // pred_region
      _
    $region29: #{entire_estimator_forward.1} parent=1 // pred_fallthru
      _
    // Predicated region
    $region30: #{entire_estimator_forward.1} parent=1 // pred_check
      _
    $region31: #{entire_estimator_forward.1} parent=1 // pred_check_branch
      %55 = sbr.rel (0) target = $region33
    $region32: #{entire_estimator_forward.1} parent=1 // pred_region
      _
    $region33: #{entire_estimator_forward.1} parent=1 // pred_fallthru
      _
    // Predicated region
    $region34: #{entire_estimator_forward.1} parent=1 // pred_check
      _
    $region35: #{entire_estimator_forward.1} parent=1 // pred_check_branch
      %57 = sbr.rel (0) target = $region37
    $region36: #{entire_estimator_forward.1} parent=1 // pred_region
      _
    $region37: #{entire_estimator_forward.1} parent=1 // pred_fallthru
      _
    // Predicated region
    $region38: #{entire_estimator_forward.1} parent=1 // pred_check
      _
    $region39: #{entire_estimator_forward.1} parent=1 // pred_check_branch
      %59 = sbr.rel (0) target = $region41
    $region40: #{entire_estimator_forward.1} parent=1 // pred_region
      %61 = dma.done [#allocation4], 256
    $region41: #{entire_estimator_forward.1} parent=1 // pred_fallthru
      _
    // Predicated region
    $region42: #{entire_estimator_forward.1} parent=1 // pred_check
      _
    $region43: #{entire_estimator_forward.1} parent=1 // pred_check_branch
      %63 = sbr.rel (0) target = $region45
    $region44: #{entire_estimator_forward.1} parent=1 // pred_region
      %65 = dma.done [#allocation7], 768
    $region45: #{entire_estimator_forward.1} parent=1 // pred_fallthru
      _
    %v66 = vld [vmem:[%s0] sm:$0xff]
    %v67 = vld [vmem:[%s0 + $0x8] sm:$0xff]
    %v68 = vld [vmem:[%s0 + $0x10] sm:$0xff]
    %v69 = vld [vmem:[%s0 + $0x18] sm:$0xff]
    %v70 = vld [vmem:[%s0 + $0x20] sm:$0xff]
    %v71 = vld [vmem:[%s0 + $0x28] sm:$0xff]
    %v72 = vld [vmem:[%s0 + $0x30] sm:$0xff]
    %v73 = vld [vmem:[%s0 + $0x38] sm:$0xff]
    %v74 = vld [vmem:[#allocation3] sm:$0xff]
    %v75 = vld [vmem:[#allocation3 + $0x8] sm:$0xff]
    %v76 = vld [vmem:[%s1] sm:$0xff]
    %v77 = vld [vmem:[%s1 + $0x8] sm:$0xff]
    %v78 = vld [vmem:[%s1 + $0x10] sm:$0xff]
    %v79 = vld [vmem:[%s1 + $0x18] sm:$0xff]
    %v80 = vld [vmem:[%s1 + $0x20] sm:$0xff]
    %v81 = vld [vmem:[%s1 + $0x28] sm:$0xff]
    %v82 = vld [vmem:[%s1 + $0x30] sm:$0xff]
    %v83 = vld [vmem:[%s1 + $0x38] sm:$0xff]
    %v84 = vld [vmem:[#allocation6] sm:$0xff]
    %v85 = vld [vmem:[#allocation6 + $0x8] sm:$0xff]
    %v86 = vld [vmem:[#allocation6 + $0x10] sm:$0xff]
    %v87 = vld [vmem:[#allocation6 + $0x18] sm:$0xff]
    %v88 = vld [vmem:[#allocation6 + $0x20] sm:$0xff]
    %v89 = vld [vmem:[#allocation6 + $0x28] sm:$0xff]
    %vm90 = vcmask 392192
    %v92 = vsel %vm90, %v76, 0
    %v95 = vsel %vm90, %v77, 0
    %v98 = vsel %vm90, %v78, 0
    %v101 = vsel %vm90, %v79, 0
    %v104 = vsel %vm90, %v80, 0
    %v107 = vsel %vm90, %v81, 0
    %v110 = vsel %vm90, %v82, 0
    %v113 = vsel %vm90, %v83, 0
    %115 = vmatpush.msra.mxu0 0.0
    %116 = vmatpush.msra.mxu0 0.0
    %117 = vmatpush.msra.mxu0 0.0
    %118 = vmatpush.msra.mxu0 0.0
    %119 = vmatpush.msra.mxu0 0.0
    %120 = vmatpush.msra.mxu0 0.0
    %121 = vmatpush.msra.mxu0 0.0
    %122 = vmatpush.msra.mxu0 0.0
    %123 = vmatpush.msra.mxu0 0.0
    %124 = vmatpush.msra.mxu0 0.0
    %125 = vmatpush.msra.mxu0 %v89
    %126 = vmatpush.msra.mxu0 %v88
    %127 = vmatpush.msra.mxu0 %v87
    %128 = vmatpush.msra.mxu0 %v86
    %129 = vmatpush.msra.mxu0 %v85
    %130 = vmatpush.msra.mxu0 %v84
    %131 = vmatmul.f32.gmra.mxu0 %v92
    %v132 = vpop.f32.mrf.mxu0
    %v133 = vadd.f32 0.0, %v132
    %134 = vmatmul.f32.gmra.mxu0 %v95
    %v135 = vpop.f32.mrf.mxu0
    %v136 = vadd.f32 0.0, %v135
    %137 = vmatmul.f32.gmra.mxu0 %v98
    %v138 = vpop.f32.mrf.mxu0
    %v139 = vadd.f32 0.0, %v138
    %140 = vmatmul.f32.gmra.mxu0 %v101
    %v141 = vpop.f32.mrf.mxu0
    %v142 = vadd.f32 0.0, %v141
    %143 = vmatmul.f32.gmra.mxu0 %v104
    %v144 = vpop.f32.mrf.mxu0
    %v145 = vadd.f32 0.0, %v144
    %146 = vmatmul.f32.gmra.mxu0 %v107
    %v147 = vpop.f32.mrf.mxu0
    %v148 = vadd.f32 0.0, %v147
    %149 = vmatmul.f32.gmra.mxu0 %v110
    %v150 = vpop.f32.mrf.mxu0
    %v151 = vadd.f32 0.0, %v150
    %152 = vmatmul.f32.gmra.mxu0 %v113
    %v153 = vpop.f32.mrf.mxu0
    %v154 = vadd.f32 0.0, %v153
    %155 = vdwg.mxu0
    %vm156 = vcmask 130048
    %v158 = vsel %vm156, %v66, 0
    %v161 = vsel %vm156, %v67, 0
    %v164 = vsel %vm156, %v68, 0
    %v167 = vsel %vm156, %v69, 0
    %v170 = vsel %vm156, %v70, 0
    %v173 = vsel %vm156, %v71, 0
    %v176 = vsel %vm156, %v72, 0
    %v179 = vsel %vm156, %v73, 0
    %181 = vmatpush.msra.mxu0 0.0
    %182 = vmatpush.msra.mxu0 0.0
    %183 = vmatpush.msra.mxu0 0.0
    %184 = vmatpush.msra.mxu0 0.0
    %185 = vmatpush.msra.mxu0 0.0
    %186 = vmatpush.msra.mxu0 0.0
    %187 = vmatpush.msra.mxu0 0.0
    %188 = vmatpush.msra.mxu0 0.0
    %189 = vmatpush.msra.mxu0 0.0
    %190 = vmatpush.msra.mxu0 0.0
    %191 = vmatpush.msra.mxu0 0.0
    %192 = vmatpush.msra.mxu0 0.0
    %193 = vmatpush.msra.mxu0 0.0
    %194 = vmatpush.msra.mxu0 0.0
    %195 = vmatpush.msra.mxu0 %v75
    %196 = vmatpush.msra.mxu0 %v74
    %197 = vmatmul.f32.gmra.mxu0 %v158
    %v198 = vpop.f32.mrf.mxu0
    %v199 = vadd.f32 %v133, %v198
    %200 = vmatmul.f32.gmra.mxu0 %v161
    %v201 = vpop.f32.mrf.mxu0
    %v202 = vadd.f32 %v136, %v201
    %203 = vmatmul.f32.gmra.mxu0 %v164
    %v204 = vpop.f32.mrf.mxu0
    %v205 = vadd.f32 %v139, %v204
    %206 = vmatmul.f32.gmra.mxu0 %v167
    %v207 = vpop.f32.mrf.mxu0
    %v208 = vadd.f32 %v142, %v207
    %209 = vmatmul.f32.gmra.mxu0 %v170
    %v210 = vpop.f32.mrf.mxu0
    %v211 = vadd.f32 %v145, %v210
    %212 = vmatmul.f32.gmra.mxu0 %v173
    %v213 = vpop.f32.mrf.mxu0
    %v214 = vadd.f32 %v148, %v213
    %215 = vmatmul.f32.gmra.mxu0 %v176
    %v216 = vpop.f32.mrf.mxu0
    %v217 = vadd.f32 %v151, %v216
    %218 = vmatmul.f32.gmra.mxu0 %v179
    %v219 = vpop.f32.mrf.mxu0
    %v220 = vadd.f32 %v154, %v219
    %221 = vdwg.mxu0
    %v222 = vld [vmem:[%s4] sm:$0x1]
    %v224 = vperm.slane %v222, 0
    %v226 = vadd.f32 %v199, %v224
    %v227 = vadd.f32 %v202, %v224
    %v228 = vadd.f32 %v205, %v224
    %v229 = vadd.f32 %v208, %v224
    %v230 = vadd.f32 %v211, %v224
    %v231 = vadd.f32 %v214, %v224
    %v232 = vadd.f32 %v217, %v224
    %v233 = vadd.f32 %v220, %v224
    %v234 = vpack.c.bf16 %v227, %v226
    %v235 = vpack.c.bf16 %v229, %v228
    %v236 = vpack.c.bf16 %v231, %v230
    %v237 = vpack.c.bf16 %v233, %v232
    %v238 = vld [vmem:[%s5] sm:$0xf]
    %v239 = vld [vmem:[%s5 + $0x4] sm:$0xf]
    %v240 = vld [vmem:[%s5 + $0x8] sm:$0xf]
    %v241 = vld [vmem:[%s5 + $0xc] sm:$0xf]
    %v242 = vld [vmem:[%s5 + $0x10] sm:$0xf]
    %v243 = vld [vmem:[%s5 + $0x14] sm:$0xf]
    %v244 = vld [vmem:[%s5 + $0x18] sm:$0xf]
    %v245 = vld [vmem:[%s5 + $0x1c] sm:$0xf]
    %v246 = vld [vmem:[%s5 + $0x20] sm:$0xf]
    %v247 = vld [vmem:[%s5 + $0x24] sm:$0xf]
    %v248 = vld [vmem:[%s5 + $0x28] sm:$0xf]
    %v249 = vld [vmem:[%s5 + $0x2c] sm:$0xf]
    %v250 = vld [vmem:[%s5 + $0x30] sm:$0xf]
    %v251 = vld [vmem:[%s5 + $0x34] sm:$0xf]
    %v252 = vld [vmem:[%s5 + $0x38] sm:$0xf]
    %v253 = vld [vmem:[%s5 + $0x3c] sm:$0xf]
    %v254 = vld [vmem:[%s6] sm:$0x1]
    %v256 = vperm.slane %v254, 0
    %v274 = vunpack.c.l.b16 %v238
    %v275 = vunpack.c.l.b16 %v239
    %v276 = vunpack.c.l.b16 %v240
    %v277 = vunpack.c.l.b16 %v241
    %v278 = vunpack.c.l.b16 %v242
    %v279 = vunpack.c.l.b16 %v243
    %v280 = vunpack.c.l.b16 %v244
    %v281 = vunpack.c.l.b16 %v245
    %v282 = vunpack.c.l.b16 %v246
    %v283 = vunpack.c.l.b16 %v247
    %v284 = vunpack.c.l.b16 %v248
    %v285 = vunpack.c.l.b16 %v249
    %v286 = vunpack.c.l.b16 %v250
    %v287 = vunpack.c.l.b16 %v251
    %v288 = vunpack.c.l.b16 %v252
    %v289 = vunpack.c.l.b16 %v253
    %v290 = vpack.c.b16 %v275, %v274
    %v291 = vpack.c.b16 %v277, %v276
    %v292 = vpack.c.b16 %v279, %v278
    %v293 = vpack.c.b16 %v281, %v280
    %v294 = vpack.c.b16 %v283, %v282
    %v295 = vpack.c.b16 %v285, %v284
    %v296 = vpack.c.b16 %v287, %v286
    %v297 = vpack.c.b16 %v289, %v288
    %306 = vmatpush.bf16.msra.mxu0 %v297
    %307 = vmatpush.bf16.msra.mxu0 %v296
    %308 = vmatpush.bf16.msra.mxu0 %v295
    %309 = vmatpush.bf16.msra.mxu0 %v294
    %310 = vmatpush.bf16.msra.mxu0 %v293
    %311 = vmatpush.bf16.msra.mxu0 %v292
    %312 = vmatpush.bf16.msra.mxu0 %v291
    %313 = vmatpush.bf16.msra.mxu0 %v290
    %314 = vmatmul.bf16.gmra.mxu0 %v234
    %v315 = vpop.f32.mrf.mxu0
    %v316 = vadd.f32 %v256, %v315
    %v317 = vpop.f32.mrf.mxu0
    %v318 = vadd.f32 %v256, %v317
    %319 = vmatmul.bf16.gmra.mxu0 %v235
    %v320 = vpop.f32.mrf.mxu0
    %v321 = vadd.f32 %v256, %v320
    %v322 = vpop.f32.mrf.mxu0
    %v323 = vadd.f32 %v256, %v322
    %324 = vmatmul.bf16.gmra.mxu0 %v236
    %v325 = vpop.f32.mrf.mxu0
    %v326 = vadd.f32 %v256, %v325
    %v327 = vpop.f32.mrf.mxu0
    %v328 = vadd.f32 %v256, %v327
    %329 = vmatmul.bf16.gmra.mxu0 %v237
    %v330 = vpop.f32.mrf.mxu0
    %v331 = vadd.f32 %v256, %v330
    %v332 = vpop.f32.mrf.mxu0
    %v333 = vadd.f32 %v256, %v332
    %334 = vdwg.mxu0
    %v335 = vmax.f32 %v316, 0.0
    %v336 = vmax.f32 %v318, 0.0
    %v337 = vmax.f32 %v321, 0.0
    %v338 = vmax.f32 %v323, 0.0
    %v339 = vmax.f32 %v326, 0.0
    %v340 = vmax.f32 %v328, 0.0
    %v341 = vmax.f32 %v331, 0.0
    %v342 = vmax.f32 %v333, 0.0
    %v343 = vadd.f32 %v226, %v335
    %v344 = vadd.f32 %v227, %v336
    %v345 = vadd.f32 %v228, %v337
    %v346 = vadd.f32 %v229, %v338
    %v347 = vadd.f32 %v230, %v339
    %v348 = vadd.f32 %v231, %v340
    %v349 = vadd.f32 %v232, %v341
    %v350 = vadd.f32 %v233, %v342
    %v351 = vpack.c.bf16 %v344, %v343
    %v352 = vpack.c.bf16 %v346, %v345
    %v353 = vpack.c.bf16 %v348, %v347
    %v354 = vpack.c.bf16 %v350, %v349
    %s355 = scalar_lea.vmem %s5, 64
    %v356 = vld [vmem:[%s355] sm:$0xf]
    %v357 = vld [vmem:[%s355 + $0x4] sm:$0xf]
    %v358 = vld [vmem:[%s355 + $0x8] sm:$0xf]
    %v359 = vld [vmem:[%s355 + $0xc] sm:$0xf]
    %v360 = vld [vmem:[%s355 + $0x10] sm:$0xf]
    %v361 = vld [vmem:[%s355 + $0x14] sm:$0xf]
    %v362 = vld [vmem:[%s355 + $0x18] sm:$0xf]
    %v363 = vld [vmem:[%s355 + $0x1c] sm:$0xf]
    %v364 = vld [vmem:[%s355 + $0x20] sm:$0xf]
    %v365 = vld [vmem:[%s355 + $0x24] sm:$0xf]
    %v366 = vld [vmem:[%s355 + $0x28] sm:$0xf]
    %v367 = vld [vmem:[%s355 + $0x2c] sm:$0xf]
    %v368 = vld [vmem:[%s355 + $0x30] sm:$0xf]
    %v369 = vld [vmem:[%s355 + $0x34] sm:$0xf]
    %v370 = vld [vmem:[%s355 + $0x38] sm:$0xf]
    %v371 = vld [vmem:[%s355 + $0x3c] sm:$0xf]
    %s372 = scalar_lea.vmem %s6, 1
    %v373 = vld [vmem:[%s372] sm:$0x1]
    %v375 = vperm.slane %v373, 0
    %v393 = vunpack.c.l.b16 %v356
    %v394 = vunpack.c.l.b16 %v357
    %v395 = vunpack.c.l.b16 %v358
    %v396 = vunpack.c.l.b16 %v359
    %v397 = vunpack.c.l.b16 %v360
    %v398 = vunpack.c.l.b16 %v361
    %v399 = vunpack.c.l.b16 %v362
    %v400 = vunpack.c.l.b16 %v363
    %v401 = vunpack.c.l.b16 %v364
    %v402 = vunpack.c.l.b16 %v365
    %v403 = vunpack.c.l.b16 %v366
    %v404 = vunpack.c.l.b16 %v367
    %v405 = vunpack.c.l.b16 %v368
    %v406 = vunpack.c.l.b16 %v369
    %v407 = vunpack.c.l.b16 %v370
    %v408 = vunpack.c.l.b16 %v371
    %v409 = vpack.c.b16 %v394, %v393
    %v410 = vpack.c.b16 %v396, %v395
    %v411 = vpack.c.b16 %v398, %v397
    %v412 = vpack.c.b16 %v400, %v399
    %v413 = vpack.c.b16 %v402, %v401
    %v414 = vpack.c.b16 %v404, %v403
    %v415 = vpack.c.b16 %v406, %v405
    %v416 = vpack.c.b16 %v408, %v407
    %425 = vmatpush.bf16.msra.mxu0 %v416
    %426 = vmatpush.bf16.msra.mxu0 %v415
    %427 = vmatpush.bf16.msra.mxu0 %v414
    %428 = vmatpush.bf16.msra.mxu0 %v413
    %429 = vmatpush.bf16.msra.mxu0 %v412
    %430 = vmatpush.bf16.msra.mxu0 %v411
    %431 = vmatpush.bf16.msra.mxu0 %v410
    %432 = vmatpush.bf16.msra.mxu0 %v409
    %433 = vmatmul.bf16.gmra.mxu0 %v351
    %v434 = vpop.f32.mrf.mxu0
    %v435 = vadd.f32 %v375, %v434
    %v436 = vpop.f32.mrf.mxu0
    %v437 = vadd.f32 %v375, %v436
    %438 = vmatmul.bf16.gmra.mxu0 %v352
    %v439 = vpop.f32.mrf.mxu0
    %v440 = vadd.f32 %v375, %v439
    %v441 = vpop.f32.mrf.mxu0
    %v442 = vadd.f32 %v375, %v441
    %443 = vmatmul.bf16.gmra.mxu0 %v353
    %v444 = vpop.f32.mrf.mxu0
    %v445 = vadd.f32 %v375, %v444
    %v446 = vpop.f32.mrf.mxu0
    %v447 = vadd.f32 %v375, %v446
    %448 = vmatmul.bf16.gmra.mxu0 %v354
    %v449 = vpop.f32.mrf.mxu0
    %v450 = vadd.f32 %v375, %v449
    %v451 = vpop.f32.mrf.mxu0
    %v452 = vadd.f32 %v375, %v451
    %453 = vdwg.mxu0
    %v454 = vmax.f32 %v435, 0.0
    %v455 = vmax.f32 %v437, 0.0
    %v456 = vmax.f32 %v440, 0.0
    %v457 = vmax.f32 %v442, 0.0
    %v458 = vmax.f32 %v445, 0.0
    %v459 = vmax.f32 %v447, 0.0
    %v460 = vmax.f32 %v450, 0.0
    %v461 = vmax.f32 %v452, 0.0
    %v462 = vadd.f32 %v343, %v454
    %v463 = vadd.f32 %v344, %v455
    %v464 = vadd.f32 %v345, %v456
    %v465 = vadd.f32 %v346, %v457
    %v466 = vadd.f32 %v347, %v458
    %v467 = vadd.f32 %v348, %v459
    %v468 = vadd.f32 %v349, %v460
    %v469 = vadd.f32 %v350, %v461
    %v470 = vpack.c.bf16 %v463, %v462
    %v471 = vpack.c.bf16 %v465, %v464
    %v472 = vpack.c.bf16 %v467, %v466
    %v473 = vpack.c.bf16 %v469, %v468
    %s474 = scalar_lea.vmem %s5, 128
    %v475 = vld [vmem:[%s474] sm:$0xf]
    %v476 = vld [vmem:[%s474 + $0x4] sm:$0xf]
    %v477 = vld [vmem:[%s474 + $0x8] sm:$0xf]
    %v478 = vld [vmem:[%s474 + $0xc] sm:$0xf]
    %v479 = vld [vmem:[%s474 + $0x10] sm:$0xf]
    %v480 = vld [vmem:[%s474 + $0x14] sm:$0xf]
    %v481 = vld [vmem:[%s474 + $0x18] sm:$0xf]
    %v482 = vld [vmem:[%s474 + $0x1c] sm:$0xf]
    %v483 = vld [vmem:[%s474 + $0x20] sm:$0xf]
    %v484 = vld [vmem:[%s474 + $0x24] sm:$0xf]
    %v485 = vld [vmem:[%s474 + $0x28] sm:$0xf]
    %v486 = vld [vmem:[%s474 + $0x2c] sm:$0xf]
    %v487 = vld [vmem:[%s474 + $0x30] sm:$0xf]
    %v488 = vld [vmem:[%s474 + $0x34] sm:$0xf]
    %v489 = vld [vmem:[%s474 + $0x38] sm:$0xf]
    %v490 = vld [vmem:[%s474 + $0x3c] sm:$0xf]
    %s491 = scalar_lea.vmem %s6, 2
    %v492 = vld [vmem:[%s491] sm:$0x1]
    %v494 = vperm.slane %v492, 0
    %v512 = vunpack.c.l.b16 %v475
    %v513 = vunpack.c.l.b16 %v476
    %v514 = vunpack.c.l.b16 %v477
    %v515 = vunpack.c.l.b16 %v478
    %v516 = vunpack.c.l.b16 %v479
    %v517 = vunpack.c.l.b16 %v480
    %v518 = vunpack.c.l.b16 %v481
    %v519 = vunpack.c.l.b16 %v482
    %v520 = vunpack.c.l.b16 %v483
    %v521 = vunpack.c.l.b16 %v484
    %v522 = vunpack.c.l.b16 %v485
    %v523 = vunpack.c.l.b16 %v486
    %v524 = vunpack.c.l.b16 %v487
    %v525 = vunpack.c.l.b16 %v488
    %v526 = vunpack.c.l.b16 %v489
    %v527 = vunpack.c.l.b16 %v490
    %v528 = vpack.c.b16 %v513, %v512
    %v529 = vpack.c.b16 %v515, %v514
    %v530 = vpack.c.b16 %v517, %v516
    %v531 = vpack.c.b16 %v519, %v518
    %v532 = vpack.c.b16 %v521, %v520
    %v533 = vpack.c.b16 %v523, %v522
    %v534 = vpack.c.b16 %v525, %v524
    %v535 = vpack.c.b16 %v527, %v526
    %544 = vmatpush.bf16.msra.mxu0 %v535
    %545 = vmatpush.bf16.msra.mxu0 %v534
    %546 = vmatpush.bf16.msra.mxu0 %v533
    %547 = vmatpush.bf16.msra.mxu0 %v532
    %548 = vmatpush.bf16.msra.mxu0 %v531
    %549 = vmatpush.bf16.msra.mxu0 %v530
    %550 = vmatpush.bf16.msra.mxu0 %v529
    %551 = vmatpush.bf16.msra.mxu0 %v528
    %552 = vmatmul.bf16.gmra.mxu0 %v470
    %v553 = vpop.f32.mrf.mxu0
    %v554 = vadd.f32 %v494, %v553
    %v555 = vpop.f32.mrf.mxu0
    %v556 = vadd.f32 %v494, %v555
    %557 = vmatmul.bf16.gmra.mxu0 %v471
    %v558 = vpop.f32.mrf.mxu0
    %v559 = vadd.f32 %v494, %v558
    %v560 = vpop.f32.mrf.mxu0
    %v561 = vadd.f32 %v494, %v560
    %562 = vmatmul.bf16.gmra.mxu0 %v472
    %v563 = vpop.f32.mrf.mxu0
    %v564 = vadd.f32 %v494, %v563
    %v565 = vpop.f32.mrf.mxu0
    %v566 = vadd.f32 %v494, %v565
    %567 = vmatmul.bf16.gmra.mxu0 %v473
    %v568 = vpop.f32.mrf.mxu0
    %v569 = vadd.f32 %v494, %v568
    %v570 = vpop.f32.mrf.mxu0
    %v571 = vadd.f32 %v494, %v570
    %572 = vdwg.mxu0
    %v573 = vmax.f32 %v554, 0.0
    %v574 = vmax.f32 %v556, 0.0
    %v575 = vmax.f32 %v559, 0.0
    %v576 = vmax.f32 %v561, 0.0
    %v577 = vmax.f32 %v564, 0.0
    %v578 = vmax.f32 %v566, 0.0
    %v579 = vmax.f32 %v569, 0.0
    %v580 = vmax.f32 %v571, 0.0
    %v581 = vadd.f32 %v462, %v573
    %v582 = vadd.f32 %v463, %v574
    %v583 = vadd.f32 %v464, %v575
    %v584 = vadd.f32 %v465, %v576
    %v585 = vadd.f32 %v466, %v577
    %v586 = vadd.f32 %v467, %v578
    %v587 = vadd.f32 %v468, %v579
    %v588 = vadd.f32 %v469, %v580
    %v589 = vld [vmem:[%s7] sm:$0x1]
    %s590 = sld [smem:[#allocation2]]
    %v591 = vstv %s590
    %592 = vmatpush.xpose.msra.mxu0 0.0
    %593 = vmatpush.xpose.msra.mxu0 0.0
    %594 = vmatpush.xpose.msra.mxu0 0.0
    %595 = vmatpush.xpose.msra.mxu0 0.0
    %596 = vmatpush.xpose.msra.mxu0 0.0
    %597 = vmatpush.xpose.msra.mxu0 0.0
    %598 = vmatpush.xpose.msra.mxu0 0.0
    %599 = vmatpush.xpose.msra.mxu0 0.0
    %600 = vmatpush.xpose.msra.mxu0 %v588
    %601 = vmatpush.xpose.msra.mxu0 %v587
    %602 = vmatpush.xpose.msra.mxu0 %v586
    %603 = vmatpush.xpose.msra.mxu0 %v585
    %604 = vmatpush.xpose.msra.mxu0 %v584
    %605 = vmatpush.xpose.msra.mxu0 %v583
    %606 = vmatpush.xpose.msra.mxu0 %v582
    %607 = vmatpush.xpose.msra.mxu0 %v581
    %608 = vmatmul.f32.gmra.mxu0 %v589
    %v609 = vpop.f32.mrf.mxu0
    %v610 = vadd.f32 %v591, %v609
    %611 = vdwg.mxu0
    %vm612 = vcmask 516096
    %613 = vst.msk [vmem:[#allocation8] sm:$0x1] %vm612, %v610
    // Predicated region
    $region46: #{entire_estimator_forward.1} parent=1 // pred_check
      _
    $region47: #{entire_estimator_forward.1} parent=1 // pred_check_branch
      %615 = sbr.rel (0) target = $region49
    $region48: #{entire_estimator_forward.1} parent=1 // pred_region
      %617 = vsyncadd [#allocation5], 0
      %s619 = sshll.u32 [#allocation8], 4
      %s620 = int_to_ptr.vmem [resolvable:$true] %s619
      %s621 = sshll.u32 %s9, 4
      %s622 = int_to_ptr.hbm [resolvable:$true] %s621
      %624 = dma.vmem_to_hbm [thread:$0]  %s620, 16, %s622, [#allocation5]
    $region49: #{entire_estimator_forward.1} parent=1 // pred_fallthru
      _
    // Predicated region
    $region50: #{entire_estimator_forward.1} parent=1 // pred_check
      _
    $region51: #{entire_estimator_forward.1} parent=1 // pred_check_branch
      %626 = sbr.rel (0) target = $region53
    $region52: #{entire_estimator_forward.1} parent=1 // pred_region
      %628 = dma.done [#allocation5], 16
    $region53: #{entire_estimator_forward.1} parent=1 // pred_fallthru
      _
    %629 = vsyncpa [#allocation4], 1
    %630 = vsyncpa [#allocation7], 1
    %631 = vsyncpa [#allocation5], 1

</llo_original>
